<compile_context>
chip_gen: v6e
topology: v6e:2x2x1
jax: 0.10.0
libtpu: 0.0.40
codegen_flags: <defaults>
</compile_context>

<pallas_src>
import functools

import jax
import jax.numpy as jnp
from jax.experimental import pallas as pl
from jax.experimental.pallas import tpu as pltpu

EPS = 1e-5
A_PAD = 128          # padded action dim (full lane width)
NEG_INF = -1e30      # bias pad: exp(pad - max) underflows to exactly 0


# ---------------- Fused Pallas kernel ----------------

def policy_head_kernel(x_ref, w_ref, cb_ref, g_ref, b_ref, fw_ref, fb_ref,
                       o_ref, *, B, F, HW, inv_n):
    # x_ref:  [B, C, HW]      contiguous NCHW flatten of the input
    # w_ref:  [F, C]          1x1-conv weight (compact)
    # cb_ref: [F, 1]          conv bias
    # g_ref:  [F, 1]          BN gamma
    # b_ref:  [F, 1]          BN beta
    # fw_ref: [F*HW, A_PAD]   FC weight, rows in (f, h, w) order, zero-pad cols
    # fb_ref: [1, A_PAD]      FC bias (-1e30 in padded columns)
    # o_ref:  [B, A_PAD]      padded log-probs
    w = w_ref[...]
    cb = cb_ref[...]

    # --- 1x1 conv, per batch sample (B unrolled at trace time) ---
    ys = []
    for bi in range(B):
        xb = x_ref[bi]                                            # [C, HW]
        yb = jnp.dot(w, xb, preferred_element_type=jnp.float32) + cb  # [F, HW]
        ys.append(yb)

    # --- BatchNorm (train mode): biased batch stats over (B, HW) per channel ---
    s1 = ys[0]
    for yb in ys[1:]:
        s1 = s1 + yb
    mean = jnp.sum(s1, axis=1, keepdims=True) * inv_n             # [F, 1]

    s2 = None
    for yb in ys:
        d = yb - mean
        sq = jnp.sum(d * d, axis=1, keepdims=True)
        s2 = sq if s2 is None else s2 + sq
    var = s2 * inv_n                                              # biased var

    scale = g_ref[...] * jax.lax.rsqrt(var + EPS)                 # [F, 1]
    shift = b_ref[...] - mean * scale                             # [F, 1]

    # --- ReLU + FC (block matmuls over f == the (f,h,w) flatten) + log_softmax ---
    fb = fb_ref[...]                                              # [1, A_PAD]
    for bi in range(B):
        act = jnp.maximum(ys[bi] * scale + shift, 0.0)            # [F, HW]
        logits = fb
        for f in range(F):
            logits = logits + jnp.dot(act[f:f + 1, :],
                                      fw_ref[f * HW:(f + 1) * HW, :],
                                      preferred_element_type=jnp.float32)
        m = jnp.max(logits, axis=1, keepdims=True)
        s = logits - m
        lse = jnp.log(jnp.sum(jnp.exp(s), axis=1, keepdims=True))
        o_ref[bi:bi + 1, :] = s - lse


# ---------------- One-time parameter preparation ----------------

def prepare_params(params, H, W):
    """Reorder / pad weights into kernel layout ONCE (not per forward call)."""
    F_, C = params["conv_w"].shape[0], params["conv_w"].shape[1]
    A = params["fc_b"].shape[0]
    HW = H * W

    w = params["conv_w"][:, :, 0, 0].astype(jnp.float32)          # [F, C]
    cb = params["conv_b"].astype(jnp.float32).reshape(F_, 1)
    g = params["bn_gamma"].astype(jnp.float32).reshape(F_, 1)
    b = params["bn_beta"].astype(jnp.float32).reshape(F_, 1)

    # fc_w is [A, F*HW] already in the (f, h, w) flatten order -> transpose + pad.
    fw = jnp.zeros((F_ * HW, A_PAD), jnp.float32).at[:, :A].set(
        params["fc_w"].astype(jnp.float32).T)
    fb = jnp.full((1, A_PAD), NEG_INF, jnp.float32).at[0, :A].set(
        params["fc_b"].astype(jnp.float32))

    return {"w": w, "cb": cb, "g": g, "b": b, "fw": fw, "fb": fb,
            "A": A, "HW": HW, "F": F_, "C": C}


# ---------------- Forward wrapper ----------------

def policy_head_forward(x, prep):
    """x: NCHW float32 [B, C, H, W]. Returns log-probs [B, NUM_ACTIONS]."""
    B, C, H, W = x.shape
    HW, A, F_ = prep["HW"], prep["A"], prep["F"]
    assert HW == H * W and C == prep["C"]

    xr = x.reshape(B, C, HW)          # contiguous NCHW flatten: free, no transpose

    vmem = pl.BlockSpec(memory_space=pltpu.MemorySpace.VMEM)
    kernel = functools.partial(policy_head_kernel, B=B, F=F_, HW=HW,
                               inv_n=1.0 / (B * HW))

    flops = 2 * B * (C * F_ * HW + F_ * HW * A_PAD)
    bytes_accessed = 4 * (B * C * HW + F_ * C + 3 * F_
                          + F_ * HW * A_PAD + A_PAD + B * A_PAD)

    out = pl.pallas_call(
        kernel,
        out_shape=jax.ShapeDtypeStruct((B, A_PAD), jnp.float32),
        in_specs=[vmem] * 7,
        out_specs=vmem,
        cost_estimate=pl.CostEstimate(flops=flops,
                                      transcendentals=B * A_PAD,
                                      bytes_accessed=bytes_accessed),
    )(xr, prep["w"], prep["cb"], prep["g"], prep["b"], prep["fw"], prep["fb"])

    return out[:, :A]


# ---------------- Pure-JAX reference (PyTorch train-mode semantics) ----------------

def policy_head_reference(x, params):
    B = x.shape[0]
    cw = params["conv_w"][:, :, 0, 0]                             # [F, C]
    y = jnp.einsum("bchw,fc->bfhw", x, cw) + params["conv_b"][None, :, None, None]
    mean = jnp.mean(y, axis=(0, 2, 3), keepdims=True)
    var = jnp.mean((y - mean) ** 2, axis=(0, 2, 3), keepdims=True)  # biased
    y = (y - mean) * jax.lax.rsqrt(var + EPS)
    y = y * params["bn_gamma"][None, :, None, None] + params["bn_beta"][None, :, None, None]
    y = jnp.maximum(y, 0.0)
    y = y.reshape(B, -1)                                          # (f, h, w) order
    logits = y @ params["fc_w"].T + params["fc_b"]
    return jax.nn.log_softmax(logits, axis=1)


# ---------------- Main ----------------

if __name__ == "__main__":
    RESIDUAL_FILTERS = 32
    POLICY_FILTERS = 4
    BOARD_SIZE = 8
    NUM_ACTIONS = 65
    B = 2

    key = jax.random.PRNGKey(0)
    kx, kcw, kcb, kg, kbeta, kfw, kfb = jax.random.split(key, 7)

    x = jax.random.normal(kx, (B, RESIDUAL_FILTERS, BOARD_SIZE, BOARD_SIZE), jnp.float32)

    params = {
        "conv_w": 0.1 * jax.random.normal(
            kcw, (POLICY_FILTERS, RESIDUAL_FILTERS, 1, 1), jnp.float32),
        "conv_b": 0.1 * jax.random.normal(kcb, (POLICY_FILTERS,), jnp.float32),
        "bn_gamma": 1.0 + 0.1 * jax.random.normal(kg, (POLICY_FILTERS,), jnp.float32),
        "bn_beta": 0.1 * jax.random.normal(kbeta, (POLICY_FILTERS,), jnp.float32),
        "fc_w": 0.05 * jax.random.normal(
            kfw, (NUM_ACTIONS, BOARD_SIZE * BOARD_SIZE * POLICY_FILTERS), jnp.float32),
        "fc_b": 0.05 * jax.random.normal(kfb, (NUM_ACTIONS,), jnp.float32),
    }

    prep = prepare_params(params, BOARD_SIZE, BOARD_SIZE)     # one-time weight prep

    out = policy_head_forward(x, prep)
    out = jax.block_until_ready(out)

    ref = policy_head_reference(x, params)
    assert out.shape == (B, NUM_ACTIONS), out.shape
    err = float(jnp.max(jnp.abs(out - ref)))
    assert jnp.allclose(out, ref, atol=2e-4, rtol=2e-4), err

    print("KERNEL_OK")
</pallas_src>

<mosaic_0001>
module attributes {stable_mosaic.version = 11 : i64} {
  func.func @policy_head_kernel(%arg0: memref<2x32x64xf32, #tpu.memory_space<vmem>>, %arg1: memref<4x32xf32, #tpu.memory_space<vmem>>, %arg2: memref<4x1xf32, #tpu.memory_space<vmem>>, %arg3: memref<4x1xf32, #tpu.memory_space<vmem>>, %arg4: memref<4x1xf32, #tpu.memory_space<vmem>>, %arg5: memref<256x128xf32, #tpu.memory_space<vmem>>, %arg6: memref<1x128xf32, #tpu.memory_space<vmem>>, %arg7: memref<2x128xf32, #tpu.memory_space<vmem>>) attributes {dimension_semantics = [], scalar_prefetch = 0 : i64, scratch_operands = 0 : i64, tpu.core_type = #tpu.core_type<tc>} {
    %c0 = arith.constant 0 : index
    %c0_0 = arith.constant 0 : index
    %0 = vector.load %arg1[%c0, %c0_0] : memref<4x32xf32, #tpu.memory_space<vmem>>, vector<4x32xf32>
    %c0_1 = arith.constant 0 : index
    %c0_2 = arith.constant 0 : index
    %1 = vector.load %arg2[%c0_1, %c0_2] : memref<4x1xf32, #tpu.memory_space<vmem>>, vector<4x1xf32>
    %c0_3 = arith.constant 0 : index
    %c0_4 = arith.constant 0 : index
    %c0_5 = arith.constant 0 : index
    %2 = vector.load %arg0[%c0_3, %c0_4, %c0_5] : memref<2x32x64xf32, #tpu.memory_space<vmem>>, vector<1x32x64xf32>
    %3 = vector.shape_cast %2 : vector<1x32x64xf32> to vector<32x64xf32>
    %cst = arith.constant dense<0.000000e+00> : vector<4x64xf32>
    %4 = tpu.matmul %0, %3, %cst {dimension_numbers = #tpu.dot_dimension_numbers<[1], [0], [0], [1], [0, 0, 1, 1], [], []>} : vector<4x32xf32>, vector<32x64xf32>, vector<4x64xf32> -> vector<4x64xf32>
    %5 = vector.broadcast %1 : vector<4x1xf32> to vector<4x64xf32>
    %6 = arith.addf %4, %5 : vector<4x64xf32>
    %c1 = arith.constant 1 : index
    %c0_6 = arith.constant 0 : index
    %c0_7 = arith.constant 0 : index
    %7 = vector.load %arg0[%c1, %c0_6, %c0_7] : memref<2x32x64xf32, #tpu.memory_space<vmem>>, vector<1x32x64xf32>
    %8 = vector.shape_cast %7 : vector<1x32x64xf32> to vector<32x64xf32>
    %cst_8 = arith.constant dense<0.000000e+00> : vector<4x64xf32>
    %9 = tpu.matmul %0, %8, %cst_8 {dimension_numbers = #tpu.dot_dimension_numbers<[1], [0], [0], [1], [0, 0, 1, 1], [], []>} : vector<4x32xf32>, vector<32x64xf32>, vector<4x64xf32> -> vector<4x64xf32>
    %10 = vector.broadcast %1 : vector<4x1xf32> to vector<4x64xf32>
    %11 = arith.addf %9, %10 : vector<4x64xf32>
    %12 = arith.addf %6, %11 : vector<4x64xf32>
    %cst_9 = arith.constant dense<0.000000e+00> : vector<4xf32>
    %13 = vector.multi_reduction <add>, %12, %cst_9 [1] : vector<4x64xf32> to vector<4xf32>
    %14 = vector.shape_cast %13 : vector<4xf32> to vector<4x1xf32>
    %cst_10 = arith.constant 7.812500e-03 : f32
    %15 = vector.broadcast %cst_10 : f32 to vector<4x1xf32>
    %16 = arith.mulf %14, %15 : vector<4x1xf32>
    %17 = vector.broadcast %16 : vector<4x1xf32> to vector<4x64xf32>
    %18 = arith.subf %6, %17 : vector<4x64xf32>
    %19 = arith.mulf %18, %18 : vector<4x64xf32>
    %cst_11 = arith.constant dense<0.000000e+00> : vector<4xf32>
    %20 = vector.multi_reduction <add>, %19, %cst_11 [1] : vector<4x64xf32> to vector<4xf32>
    %21 = vector.shape_cast %20 : vector<4xf32> to vector<4x1xf32>
    %22 = vector.broadcast %16 : vector<4x1xf32> to vector<4x64xf32>
    %23 = arith.subf %11, %22 : vector<4x64xf32>
    %24 = arith.mulf %23, %23 : vector<4x64xf32>
    %cst_12 = arith.constant dense<0.000000e+00> : vector<4xf32>
    %25 = vector.multi_reduction <add>, %24, %cst_12 [1] : vector<4x64xf32> to vector<4xf32>
    %26 = vector.shape_cast %25 : vector<4xf32> to vector<4x1xf32>
    %27 = arith.addf %21, %26 : vector<4x1xf32>
    %cst_13 = arith.constant 7.812500e-03 : f32
    %28 = vector.broadcast %cst_13 : f32 to vector<4x1xf32>
    %29 = arith.mulf %27, %28 : vector<4x1xf32>
    %c0_14 = arith.constant 0 : index
    %c0_15 = arith.constant 0 : index
    %30 = vector.load %arg3[%c0_14, %c0_15] : memref<4x1xf32, #tpu.memory_space<vmem>>, vector<4x1xf32>
    %cst_16 = arith.constant 9.99999974E-6 : f32
    %31 = vector.broadcast %cst_16 : f32 to vector<4x1xf32>
    %32 = arith.addf %29, %31 : vector<4x1xf32>
    %33 = math.rsqrt %32 : vector<4x1xf32>
    %34 = arith.mulf %30, %33 : vector<4x1xf32>
    %c0_17 = arith.constant 0 : index
    %c0_18 = arith.constant 0 : index
    %35 = vector.load %arg4[%c0_17, %c0_18] : memref<4x1xf32, #tpu.memory_space<vmem>>, vector<4x1xf32>
    %36 = arith.mulf %16, %34 : vector<4x1xf32>
    %37 = arith.subf %35, %36 : vector<4x1xf32>
    %c0_19 = arith.constant 0 : index
    %c0_20 = arith.constant 0 : index
    %38 = vector.load %arg6[%c0_19, %c0_20] : memref<1x128xf32, #tpu.memory_space<vmem>>, vector<1x128xf32>
    %39 = vector.broadcast %34 : vector<4x1xf32> to vector<4x64xf32>
    %40 = arith.mulf %6, %39 : vector<4x64xf32>
    %41 = vector.broadcast %37 : vector<4x1xf32> to vector<4x64xf32>
    %42 = arith.addf %40, %41 : vector<4x64xf32>
    %cst_21 = arith.constant 0.000000e+00 : f32
    %43 = vector.broadcast %cst_21 : f32 to vector<4x64xf32>
    %44 = arith.maximumf %42, %43 : vector<4x64xf32>
    %45 = vector.extract_strided_slice %44 {offsets = [0, 0], sizes = [1, 64], strides = [1, 1]} : vector<4x64xf32> to vector<1x64xf32>
    %c0_22 = arith.constant 0 : index
    %c0_23 = arith.constant 0 : index
    %46 = vector.load %arg5[%c0_22, %c0_23] : memref<256x128xf32, #tpu.memory_space<vmem>>, vector<64x128xf32>
    %cst_24 = arith.constant dense<0.000000e+00> : vector<1x128xf32>
    %47 = tpu.matmul %45, %46, %cst_24 {dimension_numbers = #tpu.dot_dimension_numbers<[1], [0], [0], [1], [0, 0, 1, 1], [], []>} : vector<1x64xf32>, vector<64x128xf32>, vector<1x128xf32> -> vector<1x128xf32>
    %48 = arith.addf %38, %47 : vector<1x128xf32>
    %49 = vector.extract_strided_slice %44 {offsets = [1, 0], sizes = [1, 64], strides = [1, 1]} : vector<4x64xf32> to vector<1x64xf32>
    %c64 = arith.constant 64 : index
    %c0_25 = arith.constant 0 : index
    %50 = vector.load %arg5[%c64, %c0_25] : memref<256x128xf32, #tpu.memory_space<vmem>>, vector<64x128xf32>
    %cst_26 = arith.constant dense<0.000000e+00> : vector<1x128xf32>
    %51 = tpu.matmul %49, %50, %cst_26 {dimension_numbers = #tpu.dot_dimension_numbers<[1], [0], [0], [1], [0, 0, 1, 1], [], []>} : vector<1x64xf32>, vector<64x128xf32>, vector<1x128xf32> -> vector<1x128xf32>
    %52 = arith.addf %48, %51 : vector<1x128xf32>
    %53 = vector.extract_strided_slice %44 {offsets = [2, 0], sizes = [1, 64], strides = [1, 1]} : vector<4x64xf32> to vector<1x64xf32>
    %c128 = arith.constant 128 : index
    %c0_27 = arith.constant 0 : index
    %54 = vector.load %arg5[%c128, %c0_27] : memref<256x128xf32, #tpu.memory_space<vmem>>, vector<64x128xf32>
    %cst_28 = arith.constant dense<0.000000e+00> : vector<1x128xf32>
    %55 = tpu.matmul %53, %54, %cst_28 {dimension_numbers = #tpu.dot_dimension_numbers<[1], [0], [0], [1], [0, 0, 1, 1], [], []>} : vector<1x64xf32>, vector<64x128xf32>, vector<1x128xf32> -> vector<1x128xf32>
    %56 = arith.addf %52, %55 : vector<1x128xf32>
    %57 = vector.extract_strided_slice %44 {offsets = [3, 0], sizes = [1, 64], strides = [1, 1]} : vector<4x64xf32> to vector<1x64xf32>
    %c192 = arith.constant 192 : index
    %c0_29 = arith.constant 0 : index
    %58 = vector.load %arg5[%c192, %c0_29] : memref<256x128xf32, #tpu.memory_space<vmem>>, vector<64x128xf32>
    %cst_30 = arith.constant dense<0.000000e+00> : vector<1x128xf32>
    %59 = tpu.matmul %57, %58, %cst_30 {dimension_numbers = #tpu.dot_dimension_numbers<[1], [0], [0], [1], [0, 0, 1, 1], [], []>} : vector<1x64xf32>, vector<64x128xf32>, vector<1x128xf32> -> vector<1x128xf32>
    %60 = arith.addf %56, %59 : vector<1x128xf32>
    %cst_31 = arith.constant dense<0xFF800000> : vector<1xf32>
    %61 = vector.multi_reduction <maximumf>, %60, %cst_31 [1] : vector<1x128xf32> to vector<1xf32>
    %62 = vector.shape_cast %61 : vector<1xf32> to vector<1x1xf32>
    %63 = vector.broadcast %62 : vector<1x1xf32> to vector<1x128xf32>
    %64 = arith.subf %60, %63 : vector<1x128xf32>
    %65 = math.exp %64 : vector<1x128xf32>
    %cst_32 = arith.constant dense<0.000000e+00> : vector<1xf32>
    %66 = vector.multi_reduction <add>, %65, %cst_32 [1] : vector<1x128xf32> to vector<1xf32>
    %67 = vector.shape_cast %66 : vector<1xf32> to vector<1x1xf32>
    %68 = math.log %67 : vector<1x1xf32>
    %69 = vector.broadcast %68 : vector<1x1xf32> to vector<1x128xf32>
    %70 = arith.subf %64, %69 : vector<1x128xf32>
    %c0_33 = arith.constant 0 : index
    %c0_34 = arith.constant 0 : index
    %71 = vector.load %arg7[%c0_33, %c0_34] : memref<2x128xf32, #tpu.memory_space<vmem>>, vector<1x128xf32>
    tpu.vector_store %arg7[%c0_33, %c0_34], %70 {strides = array<i32>} : memref<2x128xf32, #tpu.memory_space<vmem>>, vector<1x128xf32>,
    %72 = vector.broadcast %34 : vector<4x1xf32> to vector<4x64xf32>
    %73 = arith.mulf %11, %72 : vector<4x64xf32>
    %74 = vector.broadcast %37 : vector<4x1xf32> to vector<4x64xf32>
    %75 = arith.addf %73, %74 : vector<4x64xf32>
    %cst_35 = arith.constant 0.000000e+00 : f32
    %76 = vector.broadcast %cst_35 : f32 to vector<4x64xf32>
    %77 = arith.maximumf %75, %76 : vector<4x64xf32>
    %78 = vector.extract_strided_slice %77 {offsets = [0, 0], sizes = [1, 64], strides = [1, 1]} : vector<4x64xf32> to vector<1x64xf32>
    %c0_36 = arith.constant 0 : index
    %c0_37 = arith.constant 0 : index
    %79 = vector.load %arg5[%c0_36, %c0_37] : memref<256x128xf32, #tpu.memory_space<vmem>>, vector<64x128xf32>
    %cst_38 = arith.constant dense<0.000000e+00> : vector<1x128xf32>
    %80 = tpu.matmul %78, %79, %cst_38 {dimension_numbers = #tpu.dot_dimension_numbers<[1], [0], [0], [1], [0, 0, 1, 1], [], []>} : vector<1x64xf32>, vector<64x128xf32>, vector<1x128xf32> -> vector<1x128xf32>
    %81 = arith.addf %38, %80 : vector<1x128xf32>
    %82 = vector.extract_strided_slice %77 {offsets = [1, 0], sizes = [1, 64], strides = [1, 1]} : vector<4x64xf32> to vector<1x64xf32>
    %c64_39 = arith.constant 64 : index
    %c0_40 = arith.constant 0 : index
    %83 = vector.load %arg5[%c64_39, %c0_40] : memref<256x128xf32, #tpu.memory_space<vmem>>, vector<64x128xf32>
    %cst_41 = arith.constant dense<0.000000e+00> : vector<1x128xf32>
    %84 = tpu.matmul %82, %83, %cst_41 {dimension_numbers = #tpu.dot_dimension_numbers<[1], [0], [0], [1], [0, 0, 1, 1], [], []>} : vector<1x64xf32>, vector<64x128xf32>, vector<1x128xf32> -> vector<1x128xf32>
    %85 = arith.addf %81, %84 : vector<1x128xf32>
    %86 = vector.extract_strided_slice %77 {offsets = [2, 0], sizes = [1, 64], strides = [1, 1]} : vector<4x64xf32> to vector<1x64xf32>
    %c128_42 = arith.constant 128 : index
    %c0_43 = arith.constant 0 : index
    %87 = vector.load %arg5[%c128_42, %c0_43] : memref<256x128xf32, #tpu.memory_space<vmem>>, vector<64x128xf32>
    %cst_44 = arith.constant dense<0.000000e+00> : vector<1x128xf32>
    %88 = tpu.matmul %86, %87, %cst_44 {dimension_numbers = #tpu.dot_dimension_numbers<[1], [0], [0], [1], [0, 0, 1, 1], [], []>} : vector<1x64xf32>, vector<64x128xf32>, vector<1x128xf32> -> vector<1x128xf32>
    %89 = arith.addf %85, %88 : vector<1x128xf32>
    %90 = vector.extract_strided_slice %77 {offsets = [3, 0], sizes = [1, 64], strides = [1, 1]} : vector<4x64xf32> to vector<1x64xf32>
    %c192_45 = arith.constant 192 : index
    %c0_46 = arith.constant 0 : index
    %91 = vector.load %arg5[%c192_45, %c0_46] : memref<256x128xf32, #tpu.memory_space<vmem>>, vector<64x128xf32>
    %cst_47 = arith.constant dense<0.000000e+00> : vector<1x128xf32>
    %92 = tpu.matmul %90, %91, %cst_47 {dimension_numbers = #tpu.dot_dimension_numbers<[1], [0], [0], [1], [0, 0, 1, 1], [], []>} : vector<1x64xf32>, vector<64x128xf32>, vector<1x128xf32> -> vector<1x128xf32>
    %93 = arith.addf %89, %92 : vector<1x128xf32>
    %cst_48 = arith.constant dense<0xFF800000> : vector<1xf32>
    %94 = vector.multi_reduction <maximumf>, %93, %cst_48 [1] : vector<1x128xf32> to vector<1xf32>
    %95 = vector.shape_cast %94 : vector<1xf32> to vector<1x1xf32>
    %96 = vector.broadcast %95 : vector<1x1xf32> to vector<1x128xf32>
    %97 = arith.subf %93, %96 : vector<1x128xf32>
    %98 = math.exp %97 : vector<1x128xf32>
    %cst_49 = arith.constant dense<0.000000e+00> : vector<1xf32>
    %99 = vector.multi_reduction <add>, %98, %cst_49 [1] : vector<1x128xf32> to vector<1xf32>
    %100 = vector.shape_cast %99 : vector<1xf32> to vector<1x1xf32>
    %101 = math.log %100 : vector<1x1xf32>
    %102 = vector.broadcast %101 : vector<1x1xf32> to vector<1x128xf32>
    %103 = arith.subf %97, %102 : vector<1x128xf32>
    %c1_50 = arith.constant 1 : index
    %c0_51 = arith.constant 0 : index
    %104 = vector.load %arg7[%c1_50, %c0_51] : memref<2x128xf32, #tpu.memory_space<vmem>>, vector<1x128xf32>
    tpu.vector_store %arg7[%c1_50, %c0_51], %103 {strides = array<i32>} : memref<2x128xf32, #tpu.memory_space<vmem>>, vector<1x128xf32>,
    return
  }
}

</mosaic_0001>

<llo_original>
// kernel: tpu_custom_call.1
$region0: #{tpu_custom_call.1}
  #allocation0 [shape = 'u32[]', space=smem, size = 0x4, offset = 0x4, fixed_abs, tag = 'smem constant byte address 0x4 - core index']
  #allocation1 [shape = 'u32[144,128]{1,0:T(1,128)}', space=vmem, size = 0x12000, scoped, tag = 'internal scratch']
  %s0 = inlined_call_operand.hbm [shape: f32[2,32,64], index: 0, kind: input, shape index: {}]
  %s1 = inlined_call_operand.vmem [shape: f32[4,32], index: 1, kind: input, shape index: {}]
  %s2 = inlined_call_operand.vmem [shape: f32[4,1], index: 2, kind: input, shape index: {}]
  %s3 = inlined_call_operand.vmem [shape: f32[4,1], index: 3, kind: input, shape index: {}]
  %s4 = inlined_call_operand.vmem [shape: f32[4,1], index: 4, kind: input, shape index: {}]
  %s5 = inlined_call_operand.hbm [shape: f32[256,128], index: 5, kind: input, shape index: {}]
  %s6 = inlined_call_operand.vmem [shape: f32[1,128], index: 6, kind: input, shape index: {}]
  %s7 = inlined_call_operand.hbm [shape: f32[2,128], index: 7, kind: output, shape index: {}]
  %s8 = sld [smem:[#allocation0]]
  $region46: #{tpu_custom_call.1} parent=0
    _
  %s10 = ssub.s32 1, %s8
  %s11 = scalar_select 0, %s10, %s8
  $region1: #{tpu_custom_call.1} parent=0
    #allocation2 [shape = 'u8[32768]{0}', space=vmem, size = 0x8000, scoped, tag = 'input window, operand 0, single buffered']
    #allocation3 [shape = 's32[1]{0}', space=sflag, size = 0x4, scoped, tag = 'scoped memory for tpu_custom_call.1']
    #allocation4 [shape = 's32[1]{0}', space=sflag, size = 0x4, scoped, tag = 'scoped memory for tpu_custom_call.1']
    #allocation5 [shape = 'u8[131072]{0}', space=vmem, size = 0x20000, scoped, tag = 'input window, operand 5, single buffered']
    #allocation6 [shape = 's32[1]{0}', space=sflag, size = 0x4, scoped, tag = 'scoped memory for tpu_custom_call.1']
    #allocation7 [shape = 'u8[1024]{0}', space=vmem, size = 0x400, scoped, tag = 'output window, operand 0, single buffered']
    %12 = vsyncpa [#allocation3], 0
    %13 = vsyncpa [#allocation6], 0
    %14 = vsyncpa [#allocation4], 0
    // Predicated region
    $region2: #{tpu_custom_call.1} parent=1 // pred_check
      _
    $region3: #{tpu_custom_call.1} parent=1 // pred_check_branch
      %16 = sbr.rel (0) target = $region5
    $region4: #{tpu_custom_call.1} parent=1 // pred_region
      %s18 = ssub.s32 1024, 1024
      %19 = vsyncadd [#allocation3], %s18
      %s20 = sshll.u32 [#allocation2], 4
      %s21 = int_to_ptr.vmem [resolvable:$true] %s20
      %26 = dma.hbm_to_vmem [thread:$0]  %s0, 1024, %s21, [#allocation3], 128, 128, 8
    $region5: #{tpu_custom_call.1} parent=1 // pred_fallthru
      _
    // Predicated region
    $region6: #{tpu_custom_call.1} parent=1 // pred_check
      _
    $region7: #{tpu_custom_call.1} parent=1 // pred_check_branch
      %28 = sbr.rel (0) target = $region9
    $region8: #{tpu_custom_call.1} parent=1 // pred_region
      _
    $region9: #{tpu_custom_call.1} parent=1 // pred_fallthru
      _
    // Predicated region
    $region10: #{tpu_custom_call.1} parent=1 // pred_check
      _
    $region11: #{tpu_custom_call.1} parent=1 // pred_check_branch
      %30 = sbr.rel (0) target = $region13
    $region12: #{tpu_custom_call.1} parent=1 // pred_region
      _
    $region13: #{tpu_custom_call.1} parent=1 // pred_fallthru
      _
    // Predicated region
    $region14: #{tpu_custom_call.1} parent=1 // pred_check
      _
    $region15: #{tpu_custom_call.1} parent=1 // pred_check_branch
      %32 = sbr.rel (0) target = $region17
    $region16: #{tpu_custom_call.1} parent=1 // pred_region
      _
    $region17: #{tpu_custom_call.1} parent=1 // pred_fallthru
      _
    // Predicated region
    $region18: #{tpu_custom_call.1} parent=1 // pred_check
      _
    $region19: #{tpu_custom_call.1} parent=1 // pred_check_branch
      %34 = sbr.rel (0) target = $region21
    $region20: #{tpu_custom_call.1} parent=1 // pred_region
      _
    $region21: #{tpu_custom_call.1} parent=1 // pred_fallthru
      _
    // Predicated region
    $region22: #{tpu_custom_call.1} parent=1 // pred_check
      _
    $region23: #{tpu_custom_call.1} parent=1 // pred_check_branch
      %36 = sbr.rel (0) target = $region25
    $region24: #{tpu_custom_call.1} parent=1 // pred_region
      %s38 = ssub.s32 4096, 4096
      %39 = vsyncadd [#allocation6], %s38
      %s40 = sshll.u32 [#allocation5], 4
      %s41 = int_to_ptr.vmem [resolvable:$true] %s40
      %46 = dma.hbm_to_vmem [thread:$0]  %s5, 4096, %s41, [#allocation6], 128, 128, 8
    $region25: #{tpu_custom_call.1} parent=1 // pred_fallthru
      _
    // Predicated region
    $region26: #{tpu_custom_call.1} parent=1 // pred_check
      _
    $region27: #{tpu_custom_call.1} parent=1 // pred_check_branch
      %48 = sbr.rel (0) target = $region29
    $region28: #{tpu_custom_call.1} parent=1 // pred_region
      _
    $region29: #{tpu_custom_call.1} parent=1 // pred_fallthru
      _
    // Predicated region
    $region30: #{tpu_custom_call.1} parent=1 // pred_check
      _
    $region31: #{tpu_custom_call.1} parent=1 // pred_check_branch
      %50 = sbr.rel (0) target = $region33
    $region32: #{tpu_custom_call.1} parent=1 // pred_region
      %51 = dma.done [#allocation3], 1024
    $region33: #{tpu_custom_call.1} parent=1 // pred_fallthru
      _
    // Predicated region
    $region34: #{tpu_custom_call.1} parent=1 // pred_check
      _
    $region35: #{tpu_custom_call.1} parent=1 // pred_check_branch
      %53 = sbr.rel (0) target = $region37
    $region36: #{tpu_custom_call.1} parent=1 // pred_region
      %54 = dma.done [#allocation6], 4096
    $region37: #{tpu_custom_call.1} parent=1 // pred_fallthru
      _
    %v55 = vld [vmem:[%s1] sm:$0xf]
    %v56 = vld [vmem:[%s2] sm:$0xf]
    %v57 = vld [vmem:[#allocation2] sm:$0xff]
    %v58 = vld [vmem:[#allocation2 + $0x8] sm:$0xff]
    %v59 = vld [vmem:[#allocation2 + $0x10] sm:$0xff]
    %v60 = vld [vmem:[#allocation2 + $0x18] sm:$0xff]
    %62 = vset.pattern.permute.xlu0 0
    %63 = vperm.xlu0 %62, %v56
    %v64 = vpop.permute.xlu0 %63
    %vm66 = vcmask 261120
    %v68 = vsel %vm66, %v55, 0
    %70 = vmatprep.subr.mxu0 0.0
    %71 = vmatpush1.msra.mxu0 0.0
    %72 = vmatprep.subr.mxu0 0.0
    %73 = vmatpush1.msra.mxu0 0.0
    %74 = vmatprep.subr.mxu0 0.0
    %75 = vmatpush1.msra.mxu0 0.0
    %76 = vmatprep.subr.mxu0 0.0
    %77 = vmatpush1.msra.mxu0 0.0
    %78 = vmatprep.subr.mxu0 0.0
    %79 = vmatpush1.msra.mxu0 0.0
    %80 = vmatprep.subr.mxu0 0.0
    %81 = vmatpush1.msra.mxu0 0.0
    %82 = vmatprep.subr.mxu0 0.0
    %83 = vmatpush1.msra.mxu0 0.0
    %84 = vmatprep.subr.mxu0 0.0
    %85 = vmatpush1.msra.mxu0 0.0
    %86 = vmatprep.subr.mxu0 0.0
    %87 = vmatpush1.msra.mxu0 0.0
    %88 = vmatprep.subr.mxu0 0.0
    %89 = vmatpush1.msra.mxu0 0.0
    %90 = vmatprep.subr.mxu0 0.0
    %91 = vmatpush1.msra.mxu0 0.0
    %92 = vmatprep.subr.mxu0 0.0
    %93 = vmatpush1.msra.mxu0 0.0
    %94 = vmatprep.subr.mxu0 0.0
    %95 = vmatpush1.msra.mxu0 %v60
    %96 = vmatprep.subr.mxu0 0.0
    %97 = vmatpush1.msra.mxu0 %v59
    %98 = vmatprep.subr.mxu0 0.0
    %99 = vmatpush1.msra.mxu0 %v58
    %100 = vmatprep.subr.mxu0 0.0
    %101 = vmatpush1.msra.mxu0 %v57
    %102 = vmatprep.subr.mxu0 0.0
    %103 = vmatpush2.msra.mxu0 0.0
    %104 = vmatprep.subr.mxu0 0.0
    %105 = vmatpush2.msra.mxu0 0.0
    %106 = vmatprep.subr.mxu0 0.0
    %107 = vmatpush2.msra.mxu0 0.0
    %108 = vmatprep.subr.mxu0 0.0
    %109 = vmatpush2.msra.mxu0 0.0
    %110 = vmatprep.subr.mxu0 0.0
    %111 = vmatpush2.msra.mxu0 0.0
    %112 = vmatprep.subr.mxu0 0.0
    %113 = vmatpush2.msra.mxu0 0.0
    %114 = vmatprep.subr.mxu0 0.0
    %115 = vmatpush2.msra.mxu0 0.0
    %116 = vmatprep.subr.mxu0 0.0
    %117 = vmatpush2.msra.mxu0 0.0
    %118 = vmatprep.subr.mxu0 0.0
    %119 = vmatpush2.msra.mxu0 0.0
    %120 = vmatprep.subr.mxu0 0.0
    %121 = vmatpush2.msra.mxu0 0.0
    %122 = vmatprep.subr.mxu0 0.0
    %123 = vmatpush2.msra.mxu0 0.0
    %124 = vmatprep.subr.mxu0 0.0
    %125 = vmatpush2.msra.mxu0 0.0
    %126 = vmatprep.subr.mxu0 0.0
    %127 = vmatpush2.msra.mxu0 0.0
    %128 = vmatprep.subr.mxu0 0.0
    %129 = vmatpush2.msra.mxu0 0.0
    %130 = vmatprep.subr.mxu0 0.0
    %131 = vmatpush2.msra.mxu0 0.0
    %132 = vmatprep.subr.mxu0 0.0
    %133 = vmatpush2.msra.mxu0 0.0
    %134 = vmatprep.mubr.f32.mxu0 0.0
    %135 = vmatmul.mubr.f32.gmra.mxu0 %v68
    %v136 = vpop.f32.mrf.mxu0
    %v137 = vadd.f32 %v64, %v136
    %v138 = vpop.f32.mrf.mxu0
    %139 = vdwg.mxu0
    %s140 = scalar_lea.vmem [#allocation2], 32
    %v141 = vld [vmem:[%s140] sm:$0xff]
    %v142 = vld [vmem:[%s140 + $0x8] sm:$0xff]
    %v143 = vld [vmem:[%s140 + $0x10] sm:$0xff]
    %v144 = vld [vmem:[%s140 + $0x18] sm:$0xff]
    %145 = vmatprep.subr.mxu0 0.0
    %146 = vmatpush1.msra.mxu0 0.0
    %147 = vmatprep.subr.mxu0 0.0
    %148 = vmatpush1.msra.mxu0 0.0
    %149 = vmatprep.subr.mxu0 0.0
    %150 = vmatpush1.msra.mxu0 0.0
    %151 = vmatprep.subr.mxu0 0.0
    %152 = vmatpush1.msra.mxu0 0.0
    %153 = vmatprep.subr.mxu0 0.0
    %154 = vmatpush1.msra.mxu0 0.0
    %155 = vmatprep.subr.mxu0 0.0
    %156 = vmatpush1.msra.mxu0 0.0
    %157 = vmatprep.subr.mxu0 0.0
    %158 = vmatpush1.msra.mxu0 0.0
    %159 = vmatprep.subr.mxu0 0.0
    %160 = vmatpush1.msra.mxu0 0.0
    %161 = vmatprep.subr.mxu0 0.0
    %162 = vmatpush1.msra.mxu0 0.0
    %163 = vmatprep.subr.mxu0 0.0
    %164 = vmatpush1.msra.mxu0 0.0
    %165 = vmatprep.subr.mxu0 0.0
    %166 = vmatpush1.msra.mxu0 0.0
    %167 = vmatprep.subr.mxu0 0.0
    %168 = vmatpush1.msra.mxu0 0.0
    %169 = vmatprep.subr.mxu0 0.0
    %170 = vmatpush1.msra.mxu0 %v144
    %171 = vmatprep.subr.mxu0 0.0
    %172 = vmatpush1.msra.mxu0 %v143
    %173 = vmatprep.subr.mxu0 0.0
    %174 = vmatpush1.msra.mxu0 %v142
    %175 = vmatprep.subr.mxu0 0.0
    %176 = vmatpush1.msra.mxu0 %v141
    %177 = vmatprep.subr.mxu0 0.0
    %178 = vmatpush2.msra.mxu0 0.0
    %179 = vmatprep.subr.mxu0 0.0
    %180 = vmatpush2.msra.mxu0 0.0
    %181 = vmatprep.subr.mxu0 0.0
    %182 = vmatpush2.msra.mxu0 0.0
    %183 = vmatprep.subr.mxu0 0.0
    %184 = vmatpush2.msra.mxu0 0.0
    %185 = vmatprep.subr.mxu0 0.0
    %186 = vmatpush2.msra.mxu0 0.0
    %187 = vmatprep.subr.mxu0 0.0
    %188 = vmatpush2.msra.mxu0 0.0
    %189 = vmatprep.subr.mxu0 0.0
    %190 = vmatpush2.msra.mxu0 0.0
    %191 = vmatprep.subr.mxu0 0.0
    %192 = vmatpush2.msra.mxu0 0.0
    %193 = vmatprep.subr.mxu0 0.0
    %194 = vmatpush2.msra.mxu0 0.0
    %195 = vmatprep.subr.mxu0 0.0
    %196 = vmatpush2.msra.mxu0 0.0
    %197 = vmatprep.subr.mxu0 0.0
    %198 = vmatpush2.msra.mxu0 0.0
    %199 = vmatprep.subr.mxu0 0.0
    %200 = vmatpush2.msra.mxu0 0.0
    %201 = vmatprep.subr.mxu0 0.0
    %202 = vmatpush2.msra.mxu0 0.0
    %203 = vmatprep.subr.mxu0 0.0
    %204 = vmatpush2.msra.mxu0 0.0
    %205 = vmatprep.subr.mxu0 0.0
    %206 = vmatpush2.msra.mxu0 0.0
    %207 = vmatprep.subr.mxu0 0.0
    %208 = vmatpush2.msra.mxu0 0.0
    %209 = vmatprep.mubr.f32.mxu0 0.0
    %210 = vmatmul.mubr.f32.gmra.mxu0 %v68
    %v211 = vpop.f32.mrf.mxu0
    %v212 = vadd.f32 %v64, %v211
    %v213 = vpop.f32.mrf.mxu0
    %214 = vdwg.mxu0
    %v215 = vadd.f32 %v137, %v212
    %vm216 = vcmask 519168
    %v217 = vsel %vm216, %v215, 0.0
    %218 = vadd.xlane.f32.xlu0 %v217
    %v219 = vpop.xlane.xlu0 %218
    %v220 = vmul.f32 %v219, 0.0078125
    %v221 = vsub.f32 %v137, %v220
    %v222 = vmul.f32 %v221, %v221
    %v223 = vsel %vm216, %v222, 0.0
    %224 = vadd.xlane.f32.xlu0 %v223
    %v225 = vpop.xlane.xlu0 %224
    %v226 = vsub.f32 %v212, %v220
    %v227 = vmul.f32 %v226, %v226
    %v228 = vsel %vm216, %v227, 0.0
    %229 = vadd.xlane.f32.xlu0 %v228
    %v230 = vpop.xlane.xlu0 %229
    %v231 = vadd.f32 %v225, %v230
    %v232 = vmul.f32 %v231, 0.0078125
    %v233 = vld [vmem:[%s3] sm:$0xf]
    %v234 = vadd.f32 %v232, 1e-05
    %v235 = vrsqrt.pop %v234
    %v236 = vmul.f32 %v233, %v235
    %v237 = vld [vmem:[%s4] sm:$0xf]
    %v238 = vmul.f32 %v220, %v236
    %v239 = vsub.f32 %v237, %v238
    %v240 = vld [vmem:[%s6] sm:$0x1]
    %242 = vset.pattern.permute.xlu0 0
    %243 = vperm.xlu0 %242, %v236
    %v244 = vpop.permute.xlu0 %243
    %v246 = vmul.f32 %v137, %v244
    %248 = vset.pattern.permute.xlu0 0
    %249 = vperm.xlu0 %248, %v239
    %v250 = vpop.permute.xlu0 %249
    %v252 = vadd.f32 %v246, %v250
    %v253 = vmax.f32 %v252, 0.0
    %v254 = vld [vmem:[#allocation5] sm:$0xff]
    %v255 = vld [vmem:[#allocation5 + $0x8] sm:$0xff]
    %v256 = vld [vmem:[#allocation5 + $0x10] sm:$0xff]
    %v257 = vld [vmem:[#allocation5 + $0x18] sm:$0xff]
    %v258 = vld [vmem:[#allocation5 + $0x20] sm:$0xff]
    %v259 = vld [vmem:[#allocation5 + $0x28] sm:$0xff]
    %v260 = vld [vmem:[#allocation5 + $0x30] sm:$0xff]
    %v261 = vld [vmem:[#allocation5 + $0x38] sm:$0xff]
    %vm262 = vcmask 523264
    %v264 = vsel %vm262, %v253, 0
    %266 = vmatprep.subr.mxu0 0.0
    %267 = vmatpush1.msra.mxu0 0.0
    %268 = vmatprep.subr.mxu0 0.0
    %269 = vmatpush1.msra.mxu0 0.0
    %270 = vmatprep.subr.mxu0 0.0
    %271 = vmatpush1.msra.mxu0 0.0
    %272 = vmatprep.subr.mxu0 0.0
    %273 = vmatpush1.msra.mxu0 0.0
    %274 = vmatprep.subr.mxu0 0.0
    %275 = vmatpush1.msra.mxu0 0.0
    %276 = vmatprep.subr.mxu0 0.0
    %277 = vmatpush1.msra.mxu0 0.0
    %278 = vmatprep.subr.mxu0 0.0
    %279 = vmatpush1.msra.mxu0 0.0
    %280 = vmatprep.subr.mxu0 0.0
    %281 = vmatpush1.msra.mxu0 0.0
    %282 = vmatprep.subr.mxu0 0.0
    %283 = vmatpush1.msra.mxu0 %v261
    %284 = vmatprep.subr.mxu0 0.0
    %285 = vmatpush1.msra.mxu0 %v260
    %286 = vmatprep.subr.mxu0 0.0
    %287 = vmatpush1.msra.mxu0 %v259
    %288 = vmatprep.subr.mxu0 0.0
    %289 = vmatpush1.msra.mxu0 %v258
    %290 = vmatprep.subr.mxu0 0.0
    %291 = vmatpush1.msra.mxu0 %v257
    %292 = vmatprep.subr.mxu0 0.0
    %293 = vmatpush1.msra.mxu0 %v256
    %294 = vmatprep.subr.mxu0 0.0
    %295 = vmatpush1.msra.mxu0 %v255
    %296 = vmatprep.subr.mxu0 0.0
    %297 = vmatpush1.msra.mxu0 %v254
    %298 = vmatprep.subr.mxu0 0.0
    %299 = vmatpush2.msra.mxu0 0.0
    %300 = vmatprep.subr.mxu0 0.0
    %301 = vmatpush2.msra.mxu0 0.0
    %302 = vmatprep.subr.mxu0 0.0
    %303 = vmatpush2.msra.mxu0 0.0
    %304 = vmatprep.subr.mxu0 0.0
    %305 = vmatpush2.msra.mxu0 0.0
    %306 = vmatprep.subr.mxu0 0.0
    %307 = vmatpush2.msra.mxu0 0.0
    %308 = vmatprep.subr.mxu0 0.0
    %309 = vmatpush2.msra.mxu0 0.0
    %310 = vmatprep.subr.mxu0 0.0
    %311 = vmatpush2.msra.mxu0 0.0
    %312 = vmatprep.subr.mxu0 0.0
    %313 = vmatpush2.msra.mxu0 0.0
    %314 = vmatprep.subr.mxu0 0.0
    %315 = vmatpush2.msra.mxu0 0.0
    %316 = vmatprep.subr.mxu0 0.0
    %317 = vmatpush2.msra.mxu0 0.0
    %318 = vmatprep.subr.mxu0 0.0
    %319 = vmatpush2.msra.mxu0 0.0
    %320 = vmatprep.subr.mxu0 0.0
    %321 = vmatpush2.msra.mxu0 0.0
    %322 = vmatprep.subr.mxu0 0.0
    %323 = vmatpush2.msra.mxu0 0.0
    %324 = vmatprep.subr.mxu0 0.0
    %325 = vmatpush2.msra.mxu0 0.0
    %326 = vmatprep.subr.mxu0 0.0
    %327 = vmatpush2.msra.mxu0 0.0
    %328 = vmatprep.subr.mxu0 0.0
    %329 = vmatpush2.msra.mxu0 0.0
    %330 = vmatprep.mubr.f32.mxu0 0.0
    %331 = vmatmul.mubr.f32.gmra.mxu0 %v264
    %v332 = vpop.f32.mrf.mxu0
    %v333 = vadd.f32 0.0, %v332
    %v334 = vpop.f32.mrf.mxu0
    %335 = vdwg.mxu0
    %v336 = vadd.f32 %v240, %v333
    %v337 = vld [vmem:[#allocation5 + $0x40] sm:$0xff]
    %v338 = vld [vmem:[#allocation5 + $0x48] sm:$0xff]
    %v339 = vld [vmem:[#allocation5 + $0x50] sm:$0xff]
    %v340 = vld [vmem:[#allocation5 + $0x58] sm:$0xff]
    %v341 = vld [vmem:[#allocation5 + $0x60] sm:$0xff]
    %v342 = vld [vmem:[#allocation5 + $0x68] sm:$0xff]
    %v343 = vld [vmem:[#allocation5 + $0x70] sm:$0xff]
    %v344 = vld [vmem:[#allocation5 + $0x78] sm:$0xff]
    %v345 = vrot.slane %v253, 1
    %v346 = vsel %vm262, %v345, 0
    %348 = vmatprep.subr.mxu0 0.0
    %349 = vmatpush1.msra.mxu0 0.0
    %350 = vmatprep.subr.mxu0 0.0
    %351 = vmatpush1.msra.mxu0 0.0
    %352 = vmatprep.subr.mxu0 0.0
    %353 = vmatpush1.msra.mxu0 0.0
    %354 = vmatprep.subr.mxu0 0.0
    %355 = vmatpush1.msra.mxu0 0.0
    %356 = vmatprep.subr.mxu0 0.0
    %357 = vmatpush1.msra.mxu0 0.0
    %358 = vmatprep.subr.mxu0 0.0
    %359 = vmatpush1.msra.mxu0 0.0
    %360 = vmatprep.subr.mxu0 0.0
    %361 = vmatpush1.msra.mxu0 0.0
    %362 = vmatprep.subr.mxu0 0.0
    %363 = vmatpush1.msra.mxu0 0.0
    %364 = vmatprep.subr.mxu0 0.0
    %365 = vmatpush1.msra.mxu0 %v344
    %366 = vmatprep.subr.mxu0 0.0
    %367 = vmatpush1.msra.mxu0 %v343
    %368 = vmatprep.subr.mxu0 0.0
    %369 = vmatpush1.msra.mxu0 %v342
    %370 = vmatprep.subr.mxu0 0.0
    %371 = vmatpush1.msra.mxu0 %v341
    %372 = vmatprep.subr.mxu0 0.0
    %373 = vmatpush1.msra.mxu0 %v340
    %374 = vmatprep.subr.mxu0 0.0
    %375 = vmatpush1.msra.mxu0 %v339
    %376 = vmatprep.subr.mxu0 0.0
    %377 = vmatpush1.msra.mxu0 %v338
    %378 = vmatprep.subr.mxu0 0.0
    %379 = vmatpush1.msra.mxu0 %v337
    %380 = vmatprep.subr.mxu0 0.0
    %381 = vmatpush2.msra.mxu0 0.0
    %382 = vmatprep.subr.mxu0 0.0
    %383 = vmatpush2.msra.mxu0 0.0
    %384 = vmatprep.subr.mxu0 0.0
    %385 = vmatpush2.msra.mxu0 0.0
    %386 = vmatprep.subr.mxu0 0.0
    %387 = vmatpush2.msra.mxu0 0.0
    %388 = vmatprep.subr.mxu0 0.0
    %389 = vmatpush2.msra.mxu0 0.0
    %390 = vmatprep.subr.mxu0 0.0
    %391 = vmatpush2.msra.mxu0 0.0
    %392 = vmatprep.subr.mxu0 0.0
    %393 = vmatpush2.msra.mxu0 0.0
    %394 = vmatprep.subr.mxu0 0.0
    %395 = vmatpush2.msra.mxu0 0.0
    %396 = vmatprep.subr.mxu0 0.0
    %397 = vmatpush2.msra.mxu0 0.0
    %398 = vmatprep.subr.mxu0 0.0
    %399 = vmatpush2.msra.mxu0 0.0
    %400 = vmatprep.subr.mxu0 0.0
    %401 = vmatpush2.msra.mxu0 0.0
    %402 = vmatprep.subr.mxu0 0.0
    %403 = vmatpush2.msra.mxu0 0.0
    %404 = vmatprep.subr.mxu0 0.0
    %405 = vmatpush2.msra.mxu0 0.0
    %406 = vmatprep.subr.mxu0 0.0
    %407 = vmatpush2.msra.mxu0 0.0
    %408 = vmatprep.subr.mxu0 0.0
    %409 = vmatpush2.msra.mxu0 0.0
    %410 = vmatprep.subr.mxu0 0.0
    %411 = vmatpush2.msra.mxu0 0.0
    %412 = vmatprep.mubr.f32.mxu0 0.0
    %413 = vmatmul.mubr.f32.gmra.mxu0 %v346
    %v414 = vpop.f32.mrf.mxu0
    %v415 = vadd.f32 0.0, %v414
    %v416 = vpop.f32.mrf.mxu0
    %417 = vdwg.mxu0
    %v418 = vadd.f32 %v336, %v415
    %v419 = vld [vmem:[#allocation5 + $0x80] sm:$0xff]
    %v420 = vld [vmem:[#allocation5 + $0x88] sm:$0xff]
    %v421 = vld [vmem:[#allocation5 + $0x90] sm:$0xff]
    %v422 = vld [vmem:[#allocation5 + $0x98] sm:$0xff]
    %v423 = vld [vmem:[#allocation5 + $0xa0] sm:$0xff]
    %v424 = vld [vmem:[#allocation5 + $0xa8] sm:$0xff]
    %v425 = vld [vmem:[#allocation5 + $0xb0] sm:$0xff]
    %v426 = vld [vmem:[#allocation5 + $0xb8] sm:$0xff]
    %v427 = vrot.slane %v253, 2
    %v428 = vsel %vm262, %v427, 0
    %430 = vmatprep.subr.mxu0 0.0
    %431 = vmatpush1.msra.mxu0 0.0
    %432 = vmatprep.subr.mxu0 0.0
    %433 = vmatpush1.msra.mxu0 0.0
    %434 = vmatprep.subr.mxu0 0.0
    %435 = vmatpush1.msra.mxu0 0.0
    %436 = vmatprep.subr.mxu0 0.0
    %437 = vmatpush1.msra.mxu0 0.0
    %438 = vmatprep.subr.mxu0 0.0
    %439 = vmatpush1.msra.mxu0 0.0
    %440 = vmatprep.subr.mxu0 0.0
    %441 = vmatpush1.msra.mxu0 0.0
    %442 = vmatprep.subr.mxu0 0.0
    %443 = vmatpush1.msra.mxu0 0.0
    %444 = vmatprep.subr.mxu0 0.0
    %445 = vmatpush1.msra.mxu0 0.0
    %446 = vmatprep.subr.mxu0 0.0
    %447 = vmatpush1.msra.mxu0 %v426
    %448 = vmatprep.subr.mxu0 0.0
    %449 = vmatpush1.msra.mxu0 %v425
    %450 = vmatprep.subr.mxu0 0.0
    %451 = vmatpush1.msra.mxu0 %v424
    %452 = vmatprep.subr.mxu0 0.0
    %453 = vmatpush1.msra.mxu0 %v423
    %454 = vmatprep.subr.mxu0 0.0
    %455 = vmatpush1.msra.mxu0 %v422
    %456 = vmatprep.subr.mxu0 0.0
    %457 = vmatpush1.msra.mxu0 %v421
    %458 = vmatprep.subr.mxu0 0.0
    %459 = vmatpush1.msra.mxu0 %v420
    %460 = vmatprep.subr.mxu0 0.0
    %461 = vmatpush1.msra.mxu0 %v419
    %462 = vmatprep.subr.mxu0 0.0
    %463 = vmatpush2.msra.mxu0 0.0
    %464 = vmatprep.subr.mxu0 0.0
    %465 = vmatpush2.msra.mxu0 0.0
    %466 = vmatprep.subr.mxu0 0.0
    %467 = vmatpush2.msra.mxu0 0.0
    %468 = vmatprep.subr.mxu0 0.0
    %469 = vmatpush2.msra.mxu0 0.0
    %470 = vmatprep.subr.mxu0 0.0
    %471 = vmatpush2.msra.mxu0 0.0
    %472 = vmatprep.subr.mxu0 0.0
    %473 = vmatpush2.msra.mxu0 0.0
    %474 = vmatprep.subr.mxu0 0.0
    %475 = vmatpush2.msra.mxu0 0.0
    %476 = vmatprep.subr.mxu0 0.0
    %477 = vmatpush2.msra.mxu0 0.0
    %478 = vmatprep.subr.mxu0 0.0
    %479 = vmatpush2.msra.mxu0 0.0
    %480 = vmatprep.subr.mxu0 0.0
    %481 = vmatpush2.msra.mxu0 0.0
    %482 = vmatprep.subr.mxu0 0.0
    %483 = vmatpush2.msra.mxu0 0.0
    %484 = vmatprep.subr.mxu0 0.0
    %485 = vmatpush2.msra.mxu0 0.0
    %486 = vmatprep.subr.mxu0 0.0
    %487 = vmatpush2.msra.mxu0 0.0
    %488 = vmatprep.subr.mxu0 0.0
    %489 = vmatpush2.msra.mxu0 0.0
    %490 = vmatprep.subr.mxu0 0.0
    %491 = vmatpush2.msra.mxu0 0.0
    %492 = vmatprep.subr.mxu0 0.0
    %493 = vmatpush2.msra.mxu0 0.0
    %494 = vmatprep.mubr.f32.mxu0 0.0
    %495 = vmatmul.mubr.f32.gmra.mxu0 %v428
    %v496 = vpop.f32.mrf.mxu0
    %v497 = vadd.f32 0.0, %v496
    %v498 = vpop.f32.mrf.mxu0
    %499 = vdwg.mxu0
    %v500 = vadd.f32 %v418, %v497
    %v501 = vld [vmem:[#allocation5 + $0xc0] sm:$0xff]
    %v502 = vld [vmem:[#allocation5 + $0xc8] sm:$0xff]
    %v503 = vld [vmem:[#allocation5 + $0xd0] sm:$0xff]
    %v504 = vld [vmem:[#allocation5 + $0xd8] sm:$0xff]
    %v505 = vld [vmem:[#allocation5 + $0xe0] sm:$0xff]
    %v506 = vld [vmem:[#allocation5 + $0xe8] sm:$0xff]
    %v507 = vld [vmem:[#allocation5 + $0xf0] sm:$0xff]
    %v508 = vld [vmem:[#allocation5 + $0xf8] sm:$0xff]
    %v509 = vrot.slane %v253, 3
    %v510 = vsel %vm262, %v509, 0
    %512 = vmatprep.subr.mxu0 0.0
    %513 = vmatpush1.msra.mxu0 0.0
    %514 = vmatprep.subr.mxu0 0.0
    %515 = vmatpush1.msra.mxu0 0.0
    %516 = vmatprep.subr.mxu0 0.0
    %517 = vmatpush1.msra.mxu0 0.0
    %518 = vmatprep.subr.mxu0 0.0
    %519 = vmatpush1.msra.mxu0 0.0
    %520 = vmatprep.subr.mxu0 0.0
    %521 = vmatpush1.msra.mxu0 0.0
    %522 = vmatprep.subr.mxu0 0.0
    %523 = vmatpush1.msra.mxu0 0.0
    %524 = vmatprep.subr.mxu0 0.0
    %525 = vmatpush1.msra.mxu0 0.0
    %526 = vmatprep.subr.mxu0 0.0
    %527 = vmatpush1.msra.mxu0 0.0
    %528 = vmatprep.subr.mxu0 0.0
    %529 = vmatpush1.msra.mxu0 %v508
    %530 = vmatprep.subr.mxu0 0.0
    %531 = vmatpush1.msra.mxu0 %v507
    %532 = vmatprep.subr.mxu0 0.0
    %533 = vmatpush1.msra.mxu0 %v506
    %534 = vmatprep.subr.mxu0 0.0
    %535 = vmatpush1.msra.mxu0 %v505
    %536 = vmatprep.subr.mxu0 0.0
    %537 = vmatpush1.msra.mxu0 %v504
    %538 = vmatprep.subr.mxu0 0.0
    %539 = vmatpush1.msra.mxu0 %v503
    %540 = vmatprep.subr.mxu0 0.0
    %541 = vmatpush1.msra.mxu0 %v502
    %542 = vmatprep.subr.mxu0 0.0
    %543 = vmatpush1.msra.mxu0 %v501
    %544 = vmatprep.subr.mxu0 0.0
    %545 = vmatpush2.msra.mxu0 0.0
    %546 = vmatprep.subr.mxu0 0.0
    %547 = vmatpush2.msra.mxu0 0.0
    %548 = vmatprep.subr.mxu0 0.0
    %549 = vmatpush2.msra.mxu0 0.0
    %550 = vmatprep.subr.mxu0 0.0
    %551 = vmatpush2.msra.mxu0 0.0
    %552 = vmatprep.subr.mxu0 0.0
    %553 = vmatpush2.msra.mxu0 0.0
    %554 = vmatprep.subr.mxu0 0.0
    %555 = vmatpush2.msra.mxu0 0.0
    %556 = vmatprep.subr.mxu0 0.0
    %557 = vmatpush2.msra.mxu0 0.0
    %558 = vmatprep.subr.mxu0 0.0
    %559 = vmatpush2.msra.mxu0 0.0
    %560 = vmatprep.subr.mxu0 0.0
    %561 = vmatpush2.msra.mxu0 0.0
    %562 = vmatprep.subr.mxu0 0.0
    %563 = vmatpush2.msra.mxu0 0.0
    %564 = vmatprep.subr.mxu0 0.0
    %565 = vmatpush2.msra.mxu0 0.0
    %566 = vmatprep.subr.mxu0 0.0
    %567 = vmatpush2.msra.mxu0 0.0
    %568 = vmatprep.subr.mxu0 0.0
    %569 = vmatpush2.msra.mxu0 0.0
    %570 = vmatprep.subr.mxu0 0.0
    %571 = vmatpush2.msra.mxu0 0.0
    %572 = vmatprep.subr.mxu0 0.0
    %573 = vmatpush2.msra.mxu0 0.0
    %574 = vmatprep.subr.mxu0 0.0
    %575 = vmatpush2.msra.mxu0 0.0
    %576 = vmatprep.mubr.f32.mxu0 0.0
    %577 = vmatmul.mubr.f32.gmra.mxu0 %v510
    %v578 = vpop.f32.mrf.mxu0
    %v579 = vadd.f32 0.0, %v578
    %v580 = vpop.f32.mrf.mxu0
    %581 = vdwg.mxu0
    %v582 = vadd.f32 %v500, %v579
    %vm583 = vcmask 1040384
    %v584 = vsel %vm583, %v582, -inf
    %585 = vmax.xlane.f32.xlu0 %v584
    %v586 = vpop.xlane.xlu0 %585
    %v587 = vsub.f32 %v582, %v586
    %v588 = vmul.f32 %v587, 1.442695
    %v589 = vpow.pop %v588
    %v590 = vsel %vm583, %v589, 0.0
    %591 = vadd.xlane.f32.xlu0 %v590
    %v592 = vpop.xlane.xlu0 %591
    %v593 = vlog2.pop %v592
    %v594 = vmul.f32 %v593, 0.6931472
    %v595 = vsub.f32 %v587, %v594
    %596 = vst [vmem:[#allocation7] sm:$0x1] %v595
    %v597 = vmul.f32 %v212, %v244
    %v598 = vadd.f32 %v597, %v250
    %v599 = vmax.f32 %v598, 0.0
    %v600 = vld [vmem:[#allocation5] sm:$0xff]
    %v601 = vld [vmem:[#allocation5 + $0x8] sm:$0xff]
    %v602 = vld [vmem:[#allocation5 + $0x10] sm:$0xff]
    %v603 = vld [vmem:[#allocation5 + $0x18] sm:$0xff]
    %v604 = vld [vmem:[#allocation5 + $0x20] sm:$0xff]
    %v605 = vld [vmem:[#allocation5 + $0x28] sm:$0xff]
    %v606 = vld [vmem:[#allocation5 + $0x30] sm:$0xff]
    %v607 = vld [vmem:[#allocation5 + $0x38] sm:$0xff]
    %v609 = vsel %vm262, %v599, 0
    %611 = vmatprep.subr.mxu0 0.0
    %612 = vmatpush1.msra.mxu0 0.0
    %613 = vmatprep.subr.mxu0 0.0
    %614 = vmatpush1.msra.mxu0 0.0
    %615 = vmatprep.subr.mxu0 0.0
    %616 = vmatpush1.msra.mxu0 0.0
    %617 = vmatprep.subr.mxu0 0.0
    %618 = vmatpush1.msra.mxu0 0.0
    %619 = vmatprep.subr.mxu0 0.0
    %620 = vmatpush1.msra.mxu0 0.0
    %621 = vmatprep.subr.mxu0 0.0
    %622 = vmatpush1.msra.mxu0 0.0
    %623 = vmatprep.subr.mxu0 0.0
    %624 = vmatpush1.msra.mxu0 0.0
    %625 = vmatprep.subr.mxu0 0.0
    %626 = vmatpush1.msra.mxu0 0.0
    %627 = vmatprep.subr.mxu0 0.0
    %628 = vmatpush1.msra.mxu0 %v607
    %629 = vmatprep.subr.mxu0 0.0
    %630 = vmatpush1.msra.mxu0 %v606
    %631 = vmatprep.subr.mxu0 0.0
    %632 = vmatpush1.msra.mxu0 %v605
    %633 = vmatprep.subr.mxu0 0.0
    %634 = vmatpush1.msra.mxu0 %v604
    %635 = vmatprep.subr.mxu0 0.0
    %636 = vmatpush1.msra.mxu0 %v603
    %637 = vmatprep.subr.mxu0 0.0
    %638 = vmatpush1.msra.mxu0 %v602
    %639 = vmatprep.subr.mxu0 0.0
    %640 = vmatpush1.msra.mxu0 %v601
    %641 = vmatprep.subr.mxu0 0.0
    %642 = vmatpush1.msra.mxu0 %v600
    %643 = vmatprep.subr.mxu0 0.0
    %644 = vmatpush2.msra.mxu0 0.0
    %645 = vmatprep.subr.mxu0 0.0
    %646 = vmatpush2.msra.mxu0 0.0
    %647 = vmatprep.subr.mxu0 0.0
    %648 = vmatpush2.msra.mxu0 0.0
    %649 = vmatprep.subr.mxu0 0.0
    %650 = vmatpush2.msra.mxu0 0.0
    %651 = vmatprep.subr.mxu0 0.0
    %652 = vmatpush2.msra.mxu0 0.0
    %653 = vmatprep.subr.mxu0 0.0
    %654 = vmatpush2.msra.mxu0 0.0
    %655 = vmatprep.subr.mxu0 0.0
    %656 = vmatpush2.msra.mxu0 0.0
    %657 = vmatprep.subr.mxu0 0.0
    %658 = vmatpush2.msra.mxu0 0.0
    %659 = vmatprep.subr.mxu0 0.0
    %660 = vmatpush2.msra.mxu0 0.0
    %661 = vmatprep.subr.mxu0 0.0
    %662 = vmatpush2.msra.mxu0 0.0
    %663 = vmatprep.subr.mxu0 0.0
    %664 = vmatpush2.msra.mxu0 0.0
    %665 = vmatprep.subr.mxu0 0.0
    %666 = vmatpush2.msra.mxu0 0.0
    %667 = vmatprep.subr.mxu0 0.0
    %668 = vmatpush2.msra.mxu0 0.0
    %669 = vmatprep.subr.mxu0 0.0
    %670 = vmatpush2.msra.mxu0 0.0
    %671 = vmatprep.subr.mxu0 0.0
    %672 = vmatpush2.msra.mxu0 0.0
    %673 = vmatprep.subr.mxu0 0.0
    %674 = vmatpush2.msra.mxu0 0.0
    %675 = vmatprep.mubr.f32.mxu0 0.0
    %676 = vmatmul.mubr.f32.gmra.mxu0 %v609
    %v677 = vpop.f32.mrf.mxu0
    %v678 = vadd.f32 0.0, %v677
    %v679 = vpop.f32.mrf.mxu0
    %680 = vdwg.mxu0
    %v681 = vadd.f32 %v240, %v678
    %v682 = vld [vmem:[#allocation5 + $0x40] sm:$0xff]
    %v683 = vld [vmem:[#allocation5 + $0x48] sm:$0xff]
    %v684 = vld [vmem:[#allocation5 + $0x50] sm:$0xff]
    %v685 = vld [vmem:[#allocation5 + $0x58] sm:$0xff]
    %v686 = vld [vmem:[#allocation5 + $0x60] sm:$0xff]
    %v687 = vld [vmem:[#allocation5 + $0x68] sm:$0xff]
    %v688 = vld [vmem:[#allocation5 + $0x70] sm:$0xff]
    %v689 = vld [vmem:[#allocation5 + $0x78] sm:$0xff]
    %v690 = vrot.slane %v599, 1
    %v691 = vsel %vm262, %v690, 0
    %693 = vmatprep.subr.mxu0 0.0
    %694 = vmatpush1.msra.mxu0 0.0
    %695 = vmatprep.subr.mxu0 0.0
    %696 = vmatpush1.msra.mxu0 0.0
    %697 = vmatprep.subr.mxu0 0.0
    %698 = vmatpush1.msra.mxu0 0.0
    %699 = vmatprep.subr.mxu0 0.0
    %700 = vmatpush1.msra.mxu0 0.0
    %701 = vmatprep.subr.mxu0 0.0
    %702 = vmatpush1.msra.mxu0 0.0
    %703 = vmatprep.subr.mxu0 0.0
    %704 = vmatpush1.msra.mxu0 0.0
    %705 = vmatprep.subr.mxu0 0.0
    %706 = vmatpush1.msra.mxu0 0.0
    %707 = vmatprep.subr.mxu0 0.0
    %708 = vmatpush1.msra.mxu0 0.0
    %709 = vmatprep.subr.mxu0 0.0
    %710 = vmatpush1.msra.mxu0 %v689
    %711 = vmatprep.subr.mxu0 0.0
    %712 = vmatpush1.msra.mxu0 %v688
    %713 = vmatprep.subr.mxu0 0.0
    %714 = vmatpush1.msra.mxu0 %v687
    %715 = vmatprep.subr.mxu0 0.0
    %716 = vmatpush1.msra.mxu0 %v686
    %717 = vmatprep.subr.mxu0 0.0
    %718 = vmatpush1.msra.mxu0 %v685
    %719 = vmatprep.subr.mxu0 0.0
    %720 = vmatpush1.msra.mxu0 %v684
    %721 = vmatprep.subr.mxu0 0.0
    %722 = vmatpush1.msra.mxu0 %v683
    %723 = vmatprep.subr.mxu0 0.0
    %724 = vmatpush1.msra.mxu0 %v682
    %725 = vmatprep.subr.mxu0 0.0
    %726 = vmatpush2.msra.mxu0 0.0
    %727 = vmatprep.subr.mxu0 0.0
    %728 = vmatpush2.msra.mxu0 0.0
    %729 = vmatprep.subr.mxu0 0.0
    %730 = vmatpush2.msra.mxu0 0.0
    %731 = vmatprep.subr.mxu0 0.0
    %732 = vmatpush2.msra.mxu0 0.0
    %733 = vmatprep.subr.mxu0 0.0
    %734 = vmatpush2.msra.mxu0 0.0
    %735 = vmatprep.subr.mxu0 0.0
    %736 = vmatpush2.msra.mxu0 0.0
    %737 = vmatprep.subr.mxu0 0.0
    %738 = vmatpush2.msra.mxu0 0.0
    %739 = vmatprep.subr.mxu0 0.0
    %740 = vmatpush2.msra.mxu0 0.0
    %741 = vmatprep.subr.mxu0 0.0
    %742 = vmatpush2.msra.mxu0 0.0
    %743 = vmatprep.subr.mxu0 0.0
    %744 = vmatpush2.msra.mxu0 0.0
    %745 = vmatprep.subr.mxu0 0.0
    %746 = vmatpush2.msra.mxu0 0.0
    %747 = vmatprep.subr.mxu0 0.0
    %748 = vmatpush2.msra.mxu0 0.0
    %749 = vmatprep.subr.mxu0 0.0
    %750 = vmatpush2.msra.mxu0 0.0
    %751 = vmatprep.subr.mxu0 0.0
    %752 = vmatpush2.msra.mxu0 0.0
    %753 = vmatprep.subr.mxu0 0.0
    %754 = vmatpush2.msra.mxu0 0.0
    %755 = vmatprep.subr.mxu0 0.0
    %756 = vmatpush2.msra.mxu0 0.0
    %757 = vmatprep.mubr.f32.mxu0 0.0
    %758 = vmatmul.mubr.f32.gmra.mxu0 %v691
    %v759 = vpop.f32.mrf.mxu0
    %v760 = vadd.f32 0.0, %v759
    %v761 = vpop.f32.mrf.mxu0
    %762 = vdwg.mxu0
    %v763 = vadd.f32 %v681, %v760
    %v764 = vld [vmem:[#allocation5 + $0x80] sm:$0xff]
    %v765 = vld [vmem:[#allocation5 + $0x88] sm:$0xff]
    %v766 = vld [vmem:[#allocation5 + $0x90] sm:$0xff]
    %v767 = vld [vmem:[#allocation5 + $0x98] sm:$0xff]
    %v768 = vld [vmem:[#allocation5 + $0xa0] sm:$0xff]
    %v769 = vld [vmem:[#allocation5 + $0xa8] sm:$0xff]
    %v770 = vld [vmem:[#allocation5 + $0xb0] sm:$0xff]
    %v771 = vld [vmem:[#allocation5 + $0xb8] sm:$0xff]
    %v772 = vrot.slane %v599, 2
    %v773 = vsel %vm262, %v772, 0
    %775 = vmatprep.subr.mxu0 0.0
    %776 = vmatpush1.msra.mxu0 0.0
    %777 = vmatprep.subr.mxu0 0.0
    %778 = vmatpush1.msra.mxu0 0.0
    %779 = vmatprep.subr.mxu0 0.0
    %780 = vmatpush1.msra.mxu0 0.0
    %781 = vmatprep.subr.mxu0 0.0
    %782 = vmatpush1.msra.mxu0 0.0
    %783 = vmatprep.subr.mxu0 0.0
    %784 = vmatpush1.msra.mxu0 0.0
    %785 = vmatprep.subr.mxu0 0.0
    %786 = vmatpush1.msra.mxu0 0.0
    %787 = vmatprep.subr.mxu0 0.0
    %788 = vmatpush1.msra.mxu0 0.0
    %789 = vmatprep.subr.mxu0 0.0
    %790 = vmatpush1.msra.mxu0 0.0
    %791 = vmatprep.subr.mxu0 0.0
    %792 = vmatpush1.msra.mxu0 %v771
    %793 = vmatprep.subr.mxu0 0.0
    %794 = vmatpush1.msra.mxu0 %v770
    %795 = vmatprep.subr.mxu0 0.0
    %796 = vmatpush1.msra.mxu0 %v769
    %797 = vmatprep.subr.mxu0 0.0
    %798 = vmatpush1.msra.mxu0 %v768
    %799 = vmatprep.subr.mxu0 0.0
    %800 = vmatpush1.msra.mxu0 %v767
    %801 = vmatprep.subr.mxu0 0.0
    %802 = vmatpush1.msra.mxu0 %v766
    %803 = vmatprep.subr.mxu0 0.0
    %804 = vmatpush1.msra.mxu0 %v765
    %805 = vmatprep.subr.mxu0 0.0
    %806 = vmatpush1.msra.mxu0 %v764
    %807 = vmatprep.subr.mxu0 0.0
    %808 = vmatpush2.msra.mxu0 0.0
    %809 = vmatprep.subr.mxu0 0.0
    %810 = vmatpush2.msra.mxu0 0.0
    %811 = vmatprep.subr.mxu0 0.0
    %812 = vmatpush2.msra.mxu0 0.0
    %813 = vmatprep.subr.mxu0 0.0
    %814 = vmatpush2.msra.mxu0 0.0
    %815 = vmatprep.subr.mxu0 0.0
    %816 = vmatpush2.msra.mxu0 0.0
    %817 = vmatprep.subr.mxu0 0.0
    %818 = vmatpush2.msra.mxu0 0.0
    %819 = vmatprep.subr.mxu0 0.0
    %820 = vmatpush2.msra.mxu0 0.0
    %821 = vmatprep.subr.mxu0 0.0
    %822 = vmatpush2.msra.mxu0 0.0
    %823 = vmatprep.subr.mxu0 0.0
    %824 = vmatpush2.msra.mxu0 0.0
    %825 = vmatprep.subr.mxu0 0.0
    %826 = vmatpush2.msra.mxu0 0.0
    %827 = vmatprep.subr.mxu0 0.0
    %828 = vmatpush2.msra.mxu0 0.0
    %829 = vmatprep.subr.mxu0 0.0
    %830 = vmatpush2.msra.mxu0 0.0
    %831 = vmatprep.subr.mxu0 0.0
    %832 = vmatpush2.msra.mxu0 0.0
    %833 = vmatprep.subr.mxu0 0.0
    %834 = vmatpush2.msra.mxu0 0.0
    %835 = vmatprep.subr.mxu0 0.0
    %836 = vmatpush2.msra.mxu0 0.0
    %837 = vmatprep.subr.mxu0 0.0
    %838 = vmatpush2.msra.mxu0 0.0
    %839 = vmatprep.mubr.f32.mxu0 0.0
    %840 = vmatmul.mubr.f32.gmra.mxu0 %v773
    %v841 = vpop.f32.mrf.mxu0
    %v842 = vadd.f32 0.0, %v841
    %v843 = vpop.f32.mrf.mxu0
    %844 = vdwg.mxu0
    %v845 = vadd.f32 %v763, %v842
    %v846 = vld [vmem:[#allocation5 + $0xc0] sm:$0xff]
    %v847 = vld [vmem:[#allocation5 + $0xc8] sm:$0xff]
    %v848 = vld [vmem:[#allocation5 + $0xd0] sm:$0xff]
    %v849 = vld [vmem:[#allocation5 + $0xd8] sm:$0xff]
    %v850 = vld [vmem:[#allocation5 + $0xe0] sm:$0xff]
    %v851 = vld [vmem:[#allocation5 + $0xe8] sm:$0xff]
    %v852 = vld [vmem:[#allocation5 + $0xf0] sm:$0xff]
    %v853 = vld [vmem:[#allocation5 + $0xf8] sm:$0xff]
    %v854 = vrot.slane %v599, 3
    %v855 = vsel %vm262, %v854, 0
    %857 = vmatprep.subr.mxu0 0.0
    %858 = vmatpush1.msra.mxu0 0.0
    %859 = vmatprep.subr.mxu0 0.0
    %860 = vmatpush1.msra.mxu0 0.0
    %861 = vmatprep.subr.mxu0 0.0
    %862 = vmatpush1.msra.mxu0 0.0
    %863 = vmatprep.subr.mxu0 0.0
    %864 = vmatpush1.msra.mxu0 0.0
    %865 = vmatprep.subr.mxu0 0.0
    %866 = vmatpush1.msra.mxu0 0.0
    %867 = vmatprep.subr.mxu0 0.0
    %868 = vmatpush1.msra.mxu0 0.0
    %869 = vmatprep.subr.mxu0 0.0
    %870 = vmatpush1.msra.mxu0 0.0
    %871 = vmatprep.subr.mxu0 0.0
    %872 = vmatpush1.msra.mxu0 0.0
    %873 = vmatprep.subr.mxu0 0.0
    %874 = vmatpush1.msra.mxu0 %v853
    %875 = vmatprep.subr.mxu0 0.0
    %876 = vmatpush1.msra.mxu0 %v852
    %877 = vmatprep.subr.mxu0 0.0
    %878 = vmatpush1.msra.mxu0 %v851
    %879 = vmatprep.subr.mxu0 0.0
    %880 = vmatpush1.msra.mxu0 %v850
    %881 = vmatprep.subr.mxu0 0.0
    %882 = vmatpush1.msra.mxu0 %v849
    %883 = vmatprep.subr.mxu0 0.0
    %884 = vmatpush1.msra.mxu0 %v848
    %885 = vmatprep.subr.mxu0 0.0
    %886 = vmatpush1.msra.mxu0 %v847
    %887 = vmatprep.subr.mxu0 0.0
    %888 = vmatpush1.msra.mxu0 %v846
    %889 = vmatprep.subr.mxu0 0.0
    %890 = vmatpush2.msra.mxu0 0.0
    %891 = vmatprep.subr.mxu0 0.0
    %892 = vmatpush2.msra.mxu0 0.0
    %893 = vmatprep.subr.mxu0 0.0
    %894 = vmatpush2.msra.mxu0 0.0
    %895 = vmatprep.subr.mxu0 0.0
    %896 = vmatpush2.msra.mxu0 0.0
    %897 = vmatprep.subr.mxu0 0.0
    %898 = vmatpush2.msra.mxu0 0.0
    %899 = vmatprep.subr.mxu0 0.0
    %900 = vmatpush2.msra.mxu0 0.0
    %901 = vmatprep.subr.mxu0 0.0
    %902 = vmatpush2.msra.mxu0 0.0
    %903 = vmatprep.subr.mxu0 0.0
    %904 = vmatpush2.msra.mxu0 0.0
    %905 = vmatprep.subr.mxu0 0.0
    %906 = vmatpush2.msra.mxu0 0.0
    %907 = vmatprep.subr.mxu0 0.0
    %908 = vmatpush2.msra.mxu0 0.0
    %909 = vmatprep.subr.mxu0 0.0
    %910 = vmatpush2.msra.mxu0 0.0
    %911 = vmatprep.subr.mxu0 0.0
    %912 = vmatpush2.msra.mxu0 0.0
    %913 = vmatprep.subr.mxu0 0.0
    %914 = vmatpush2.msra.mxu0 0.0
    %915 = vmatprep.subr.mxu0 0.0
    %916 = vmatpush2.msra.mxu0 0.0
    %917 = vmatprep.subr.mxu0 0.0
    %918 = vmatpush2.msra.mxu0 0.0
    %919 = vmatprep.subr.mxu0 0.0
    %920 = vmatpush2.msra.mxu0 0.0
    %921 = vmatprep.mubr.f32.mxu0 0.0
    %922 = vmatmul.mubr.f32.gmra.mxu0 %v855
    %v923 = vpop.f32.mrf.mxu0
    %v924 = vadd.f32 0.0, %v923
    %v925 = vpop.f32.mrf.mxu0
    %926 = vdwg.mxu0
    %v927 = vadd.f32 %v845, %v924
    %v928 = vsel %vm583, %v927, -inf
    %929 = vmax.xlane.f32.xlu0 %v928
    %v930 = vpop.xlane.xlu0 %929
    %v931 = vsub.f32 %v927, %v930
    %v932 = vmul.f32 %v931, 1.442695
    %v933 = vpow.pop %v932
    %v934 = vsel %vm583, %v933, 0.0
    %935 = vadd.xlane.f32.xlu0 %v934
    %v936 = vpop.xlane.xlu0 %935
    %v937 = vlog2.pop %v936
    %v938 = vmul.f32 %v937, 0.6931472
    %v939 = vsub.f32 %v931, %v938
    %940 = vst [vmem:[#allocation7 + $0x1] sm:$0x1] %v939
    // Predicated region
    $region38: #{tpu_custom_call.1} parent=1 // pred_check
      _
    $region39: #{tpu_custom_call.1} parent=1 // pred_check_branch
      %942 = sbr.rel (0) target = $region41
    $region40: #{tpu_custom_call.1} parent=1 // pred_region
      %s944 = ssub.s32 32, 32
      %945 = vsyncadd [#allocation4], %s944
      %s947 = sshll.u32 [#allocation7], 4
      %s948 = int_to_ptr.vmem [resolvable:$true] %s947
      %950 = dma.vmem_to_hbm [thread:$0]  %s948, 32, %s7, [#allocation4]
    $region41: #{tpu_custom_call.1} parent=1 // pred_fallthru
      _
    // Predicated region
    $region42: #{tpu_custom_call.1} parent=1 // pred_check
      _
    $region43: #{tpu_custom_call.1} parent=1 // pred_check_branch
      %952 = sbr.rel (0) target = $region45
    $region44: #{tpu_custom_call.1} parent=1 // pred_region
      %953 = dma.done [#allocation4], 32
    $region45: #{tpu_custom_call.1} parent=1 // pred_fallthru
      _
    %954 = vsyncpa [#allocation3], 1
    %955 = vsyncpa [#allocation6], 1
    %956 = vsyncpa [#allocation4], 1

</llo_original>
